<compile_context>
chip_gen: v7x
topology: tpu7x:2x2x1
jax: 0.10.0
libtpu: 0.0.40
codegen_flags: <defaults>
</compile_context>

<pallas_src>
import functools

import jax
import jax.numpy as jnp
from jax import lax
from jax.experimental import pallas as pl
from jax.experimental.pallas import tpu as pltpu

_MIB = 1024 * 1024


def _static_pow(x, gamma):
    """x ** gamma for a static Python exponent (int gamma -> multiply chain)."""
    g = float(gamma)
    if g == round(g) and 0.0 <= g <= 8.0:
        gi = int(round(g))
        if gi == 0:
            return jnp.ones_like(x)
        r = x
        for _ in range(gi - 1):
            r = r * x
        return r
    return jnp.power(jnp.maximum(x, 1e-30), g)


def _device_budget():
    """(vmem_limit_bytes, multi_tensorcore) for the current chip generation."""
    vmem_capacity = 64 * _MIB  # conservative default (v7x per-TC physical VMEM)
    try:
        info = pltpu.get_tpu_info()
        vmem_capacity = int(getattr(info, "vmem_capacity_bytes", vmem_capacity))
    except Exception:
        pass
    # Half of physical VMEM as the scoped limit, clamped to [16, 64] MiB:
    # -> 64 MiB on v5e/v6e (128 MiB physical), 32 MiB on v7x (64 MiB physical).
    vmem_limit = max(16 * _MIB, min(vmem_capacity // 2, 64 * _MIB))
    multi_tc = False
    try:
        kind = jax.devices()[0].device_kind.lower()
        multi_tc = ("7x" in kind) or ("v7" in kind)  # 2 TensorCores per chip
    except Exception:
        pass
    return vmem_limit, multi_tc


def _pick_tile_n(n, c, dtype, vmem_limit):
    """Rows per tile, sized against the real in-kernel VMEM footprint."""
    itemsize = jnp.dtype(dtype).itemsize
    align = max(8, 32 // itemsize)  # 8 rows for f32, 16 for bf16, 32 for int8
    # Per-row VMEM estimate:
    #   2 pipeline buffers of the native-dtype logits row
    # + ~4 live f32 copies of the row inside the kernel (cast/shift/exp/select)
    # + 3 lane-padded [tn,1] f32 temporaries (max / sum_exp / picked)
    # + double-buffered int32 target.
    bytes_per_row = 2 * c * itemsize + 4 * c * 4 + 3 * 128 * 4 + 2 * 4
    budget = vmem_limit // 2  # headroom for output blocks / semaphores / spill
    t = int(budget // bytes_per_row)
    t = min(t, 8192)          # bound the [tn,1]/[1,tn] temporary footprint
    t -= t % align
    n_pad = ((n + align - 1) // align) * align
    return max(align, min(t, n_pad))


def _row_focal(logits_ref, targets_ref, *, alpha, gamma):
    """Focal loss for the current [tn, C] tile, returned lane-dense as [1, tn]."""
    logits = logits_ref[...].astype(jnp.float32)            # [tn, C]
    tgt = targets_ref[...]                                   # [tn, 1] int32
    tn, c = logits.shape

    col = lax.broadcasted_iota(jnp.int32, (tn, c), 1)
    m = jnp.max(logits, axis=-1, keepdims=True)              # [tn, 1]
    shifted = logits - m                                      # [tn, C] (<= 0)
    sum_exp = jnp.sum(jnp.exp(shifted), axis=-1, keepdims=True)      # [tn, 1]
    # select folds into the cross-lane reduce; no one-hot f32 materialization
    picked = jnp.sum(jnp.where(col == tgt, shifted, 0.0),
                     axis=-1, keepdims=True)                  # [tn, 1]

    # Relayout to lane-dense [1, tn] BEFORE the tail: the log/exp/pow/mul tail
    # then touches ~16x fewer vregs than on the [tn, 1] column layout.
    sum_exp_r = sum_exp.reshape(1, tn)
    picked_r = picked.reshape(1, tn)
    log_p_t = picked_r - jnp.log(sum_exp_r)                   # [1, tn], <= 0
    ce = -log_p_t
    pt = jnp.exp(log_p_t)                                     # == exp(-ce)
    w = alpha * _static_pow(1.0 - pt, gamma)
    return w * ce                                             # [1, tn]


def _focal_reduce_kernel(logits_ref, targets_ref, out_ref, *, alpha, gamma,
                         n_rows, tile_n, tiles_per_core):
    p = pl.program_id(0)     # partial-sum / core index  ("parallel")
    i = pl.program_id(1)     # tile index within core    ("arbitrary")

    @pl.when(i == 0)
    def _():
        out_ref[...] = jnp.zeros_like(out_ref)

    focal = _row_focal(logits_ref, targets_ref, alpha=alpha, gamma=gamma)  # [1,tn]

    # Mask padded tail rows AND clamped duplicate tiles: the index_map clamps
    # the DMA to the last in-range block, but this UNCLAMPED offset pushes the
    # duplicate's rows past n_rows, so the select zeroes them (no double count).
    tile_idx = p * tiles_per_core + i
    row = lax.broadcasted_iota(jnp.int32, (1, tile_n), 1) + tile_idx * tile_n
    focal = jnp.where(row < n_rows, focal, 0.0)

    # Vector partial: broadcast-add the tile sum into the whole (8,128) block
    # (exactly one vreg add), instead of a scalar RMW into VMEM. Every element
    # of core p's block holds the same per-core partial; the wrapper reads one.
    out_ref[...] += jnp.sum(focal)


def _focal_elementwise_kernel(logits_ref, targets_ref, out_ref, *, alpha, gamma):
    # Lane-dense store: out block is (1, tile_n).
    out_ref[...] = _row_focal(logits_ref, targets_ref, alpha=alpha, gamma=gamma)


def focal_loss(inputs, targets, *, alpha=0.25, gamma=2.0, reduction="mean",
               tile_n=None):
    """inputs: [N, C] logits (f32/bf16); targets: [N] int class indices.

    Note: out-of-range target indices silently yield picked=0 (no error like
    F.cross_entropy); scalar alpha is applied uniformly, matching the module.
    """
    if reduction not in ("mean", "sum", "none"):
        raise ValueError(f"unknown reduction: {reduction!r}")
    if not isinstance(alpha, (float, int)):
        # TODO(synk): per-class alpha tensor (alpha.gather(0, targets)) not implemented.
        raise NotImplementedError("only scalar alpha is supported")
    if targets.ndim != 1:
        # TODO(synk): [N, C] one-hot / soft-label targets branch of F.cross_entropy not implemented.
        raise NotImplementedError("targets must be [N] class indices")

    n, c = inputs.shape
    targets_2d = targets.astype(jnp.int32).reshape(n, 1)

    vmem_limit, multi_tc = _device_budget()
    if tile_n is None:
        tile_n = _pick_tile_n(n, c, inputs.dtype, vmem_limit)
    num_tiles = pl.cdiv(n, tile_n)

    itemsize = jnp.dtype(inputs.dtype).itemsize
    cost = pl.CostEstimate(
        flops=8 * n * c,
        transcendentals=n * c + 2 * n,
        bytes_accessed=n * c * itemsize + 4 * n + 4 * n,
    )
    alpha = float(alpha)
    gamma = float(gamma)

    if reduction == "none":
        kernel = functools.partial(_focal_elementwise_kernel,
                                   alpha=alpha, gamma=gamma)
        out = pl.pallas_call(
            kernel,
            out_shape=jax.ShapeDtypeStruct((num_tiles, tile_n), jnp.float32),
            grid_spec=pltpu.PrefetchScalarGridSpec(
                num_scalar_prefetch=0,
                grid=(num_tiles,),
                in_specs=[pl.BlockSpec((tile_n, c), lambda i: (i, 0)),
                          pl.BlockSpec((tile_n, 1), lambda i: (i, 0))],
                out_specs=pl.BlockSpec((1, tile_n), lambda i: (i, 0)),
            ),
            compiler_params=pltpu.CompilerParams(
                dimension_semantics=("parallel",),
                vmem_limit_bytes=vmem_limit),
            cost_estimate=cost,
        )(inputs, targets_2d)
        # Garbage values from the padded tail tile are sliced off here.
        return out.reshape(-1)[:n]

    # 'mean' / 'sum': per-core partial sums. On 2-TC chips (v7x) a leading
    # "parallel" axis of size 2 splits the tiles between the TensorCores; on
    # single-TC chips (v5e/v6e) we keep one flat accumulator.
    num_cores = 2 if (multi_tc and num_tiles >= 2) else 1
    tiles_per_core = pl.cdiv(num_tiles, num_cores)

    def _in_map(p, i):
        # Clamp so the DMA never reads past the last block; the duplicate tile
        # is zeroed in-kernel by the unclamped row < n_rows mask.
        return (jnp.minimum(p * tiles_per_core + i, num_tiles - 1), 0)

    kernel = functools.partial(
        _focal_reduce_kernel, alpha=alpha, gamma=gamma, n_rows=n,
        tile_n=tile_n, tiles_per_core=tiles_per_core)

    partials = pl.pallas_call(
        kernel,
        out_shape=jax.ShapeDtypeStruct((num_cores * 8, 128), jnp.float32),
        grid_spec=pltpu.PrefetchScalarGridSpec(
            num_scalar_prefetch=0,
            grid=(num_cores, tiles_per_core),
            in_specs=[
                pl.BlockSpec((tile_n, c), _in_map),
                pl.BlockSpec((tile_n, 1), _in_map),
            ],
            out_specs=pl.BlockSpec((8, 128), lambda p, i: (p, 0)),
        ),
        compiler_params=pltpu.CompilerParams(
            dimension_semantics=("parallel", "arbitrary"),
            vmem_limit_bytes=vmem_limit),
        cost_estimate=cost,
    )(inputs, targets_2d)

    # Every element of core p's (8,128) block equals that core's partial sum.
    per_core = partials.reshape(num_cores, 8 * 128)[:, 0]
    total = jnp.sum(per_core)
    if reduction == "mean":
        total = total / n
    return total


def _focal_loss_ref(inputs, targets, alpha=0.25, gamma=2.0, reduction="mean"):
    # pure-JAX reference (mirrors F.cross_entropy + focal weighting)
    logp = jax.nn.log_softmax(inputs.astype(jnp.float32), axis=-1)
    ce = -jnp.take_along_axis(logp, targets[:, None].astype(jnp.int32),
                              axis=-1)[:, 0]
    pt = jnp.exp(-ce)
    fl = alpha * (1.0 - pt) ** gamma * ce
    if reduction == "mean":
        return fl.mean()
    if reduction == "sum":
        return fl.sum()
    return fl


if __name__ == "__main__":
    key = jax.random.PRNGKey(0)
    C = 32

    # Case 1: module-scale shapes (N=8, C=32), mean reduction, auto tile.
    k1, k2 = jax.random.split(key)
    N = 8
    logits = jax.random.normal(k1, (N, C), dtype=jnp.float32)
    targets = jax.random.randint(k2, (N,), 0, C, dtype=jnp.int32)
    got = jax.block_until_ready(focal_loss(logits, targets))
    ref = _focal_loss_ref(logits, targets)
    assert jnp.allclose(got, ref, rtol=1e-4, atol=1e-5), (got, ref)

    # Case 2: multi-tile with a masked partial tail tile (N=20, tile_n=8), mean.
    k3, k4 = jax.random.split(k1)
    N2 = 20
    logits2 = jax.random.normal(k3, (N2, C), dtype=jnp.float32)
    targets2 = jax.random.randint(k4, (N2,), 0, C, dtype=jnp.int32)
    got2 = jax.block_until_ready(focal_loss(logits2, targets2, tile_n=8))
    ref2 = _focal_loss_ref(logits2, targets2)
    assert jnp.allclose(got2, ref2, rtol=1e-4, atol=1e-5), (got2, ref2)

    # Case 3: even tile count (N=64, tile_n=8), sum reduction.
    k5, k6 = jax.random.split(k2)
    N3 = 64
    logits3 = jax.random.normal(k5, (N3, C), dtype=jnp.float32)
    targets3 = jax.random.randint(k6, (N3,), 0, C, dtype=jnp.int32)
    got3 = jax.block_until_ready(
        focal_loss(logits3, targets3, reduction="sum", tile_n=8))
    ref3 = _focal_loss_ref(logits3, targets3, reduction="sum")
    assert jnp.allclose(got3, ref3, rtol=1e-4, atol=1e-4), (got3, ref3)

    # Case 4: odd tile count + partial tail (N=23, tile_n=8), sum reduction
    # (exercises the clamped duplicate tile on 2-TC chips).
    k7, k8 = jax.random.split(k3)
    N4 = 23
    logits4 = jax.random.normal(k7, (N4, C), dtype=jnp.float32)
    targets4 = jax.random.randint(k8, (N4,), 0, C, dtype=jnp.int32)
    got4 = jax.block_until_ready(
        focal_loss(logits4, targets4, reduction="sum", tile_n=8))
    ref4 = _focal_loss_ref(logits4, targets4, reduction="sum")
    assert jnp.allclose(got4, ref4, rtol=1e-4, atol=1e-4), (got4, ref4)

    # Case 5: per-element ('none') reduction, single tile and multi-tile+tail.
    got5 = jax.block_until_ready(focal_loss(logits, targets, reduction="none"))
    ref5 = _focal_loss_ref(logits, targets, reduction="none")
    assert jnp.allclose(got5, ref5, rtol=1e-4, atol=1e-5), (got5, ref5)
    got5b = jax.block_until_ready(
        focal_loss(logits2, targets2, reduction="none", tile_n=8))
    ref5b = _focal_loss_ref(logits2, targets2, reduction="none")
    assert jnp.allclose(got5b, ref5b, rtol=1e-4, atol=1e-5), (got5b, ref5b)

    # Case 6: bf16 logits read natively, mean reduction.
    k9, k10 = jax.random.split(k4)
    N6 = 16
    logits6 = jax.random.normal(k9, (N6, C), dtype=jnp.float32).astype(jnp.bfloat16)
    targets6 = jax.random.randint(k10, (N6,), 0, C, dtype=jnp.int32)
    got6 = jax.block_until_ready(focal_loss(logits6, targets6))
    ref6 = _focal_loss_ref(logits6, targets6)
    assert jnp.allclose(got6, ref6, rtol=1e-3, atol=1e-3), (got6, ref6)

    print("KERNEL_OK")
</pallas_src>

<mosaic_0001>
module attributes {stable_mosaic.version = 11 : i64} {
  func.func @_focal_reduce_kernel(%arg0: i32, %arg1: i32, %arg2: memref<8x32xf32, #tpu.memory_space<vmem>>, %arg3: memref<8x1xi32, #tpu.memory_space<vmem>>, %arg4: memref<8x128xf32, #tpu.memory_space<vmem>>) attributes {dimension_semantics = [#tpu.dimension_semantics<parallel>, #tpu.dimension_semantics<arbitrary>], iteration_bounds = array<i64: 1, 1>, scalar_prefetch = 0 : i64, scratch_operands = 0 : i64, tpu.core_type = #tpu.core_type<tc>, window_params = [{transform_indices = @transform_0, window_bounds = array<i64: 8, 32>}, {transform_indices = @transform_1, window_bounds = array<i64: 8, 1>}, {transform_indices = @transform_2, window_bounds = array<i64: 8, 128>}]} {
    %c0_i32 = arith.constant 0 : i32
    %0 = arith.cmpi eq, %arg1, %c0_i32 : i32
    %1 = arith.extui %0 : i1 to i32
    %c0_i32_0 = arith.constant 0 : i32
    %2 = arith.cmpi ne, %1, %c0_i32_0 : i32
    scf.if %2 {
      %cst_17 = arith.constant 0.000000e+00 : f32
      %50 = vector.broadcast %cst_17 : f32 to vector<8x128xf32>
      %c0_18 = arith.constant 0 : index
      %c0_19 = arith.constant 0 : index
      %51 = vector.load %arg4[%c0_18, %c0_19] : memref<8x128xf32, #tpu.memory_space<vmem>>, vector<8x128xf32>
      tpu.vector_store %arg4[%c0_18, %c0_19], %50 {strides = array<i32>} : memref<8x128xf32, #tpu.memory_space<vmem>>, vector<8x128xf32>,
    } else {
    }
    %c0 = arith.constant 0 : index
    %c0_1 = arith.constant 0 : index
    %3 = vector.load %arg2[%c0, %c0_1] : memref<8x32xf32, #tpu.memory_space<vmem>>, vector<8x32xf32>
    %c0_2 = arith.constant 0 : index
    %c0_3 = arith.constant 0 : index
    %4 = vector.load %arg3[%c0_2, %c0_3] : memref<8x1xi32, #tpu.memory_space<vmem>>, vector<8x1xi32>
    %5 = tpu.iota {dimensions = array<i32: 1>} : vector<8x32xi32>
    %cst = arith.constant dense<0xFF800000> : vector<8xf32>
    %6 = vector.multi_reduction <maximumf>, %3, %cst [1] : vector<8x32xf32> to vector<8xf32>
    %7 = vector.shape_cast %6 : vector<8xf32> to vector<8x1xf32>
    %8 = vector.broadcast %7 : vector<8x1xf32> to vector<8x32xf32>
    %9 = arith.subf %3, %8 : vector<8x32xf32>
    %10 = math.exp %9 : vector<8x32xf32>
    %cst_4 = arith.constant dense<0.000000e+00> : vector<8xf32>
    %11 = vector.multi_reduction <add>, %10, %cst_4 [1] : vector<8x32xf32> to vector<8xf32>
    %12 = vector.shape_cast %11 : vector<8xf32> to vector<8x1xf32>
    %13 = vector.broadcast %4 : vector<8x1xi32> to vector<8x32xi32>
    %14 = arith.cmpi eq, %5, %13 : vector<8x32xi32>
    %cst_5 = arith.constant 0.000000e+00 : f32
    %15 = vector.broadcast %cst_5 : f32 to vector<8x32xf32>
    %16 = arith.select %14, %9, %15 : vector<8x32xi1>, vector<8x32xf32>
    %cst_6 = arith.constant dense<0.000000e+00> : vector<8xf32>
    %17 = vector.multi_reduction <add>, %16, %cst_6 [1] : vector<8x32xf32> to vector<8xf32>
    %18 = vector.shape_cast %17 : vector<8xf32> to vector<8x1xf32>
    %19 = vector.shape_cast %12 : vector<8x1xf32> to vector<1x8xf32>
    %20 = vector.shape_cast %18 : vector<8x1xf32> to vector<1x8xf32>
    %21 = math.log %19 : vector<1x8xf32>
    %22 = arith.subf %20, %21 : vector<1x8xf32>
    %cst_7 = arith.constant 0.000000e+00 : f32
    %23 = vector.broadcast %cst_7 : f32 to vector<1x8xf32>
    %24 = arith.subf %23, %22 : vector<1x8xf32>
    %25 = math.exp %22 : vector<1x8xf32>
    %cst_8 = arith.constant 1.000000e+00 : f32
    %26 = vector.broadcast %cst_8 : f32 to vector<1x8xf32>
    %27 = arith.subf %26, %25 : vector<1x8xf32>
    %28 = arith.mulf %27, %27 : vector<1x8xf32>
    %cst_9 = arith.constant 2.500000e-01 : f32
    %29 = vector.broadcast %cst_9 : f32 to vector<1x8xf32>
    %30 = arith.mulf %29, %28 : vector<1x8xf32>
    %31 = arith.mulf %30, %24 : vector<1x8xf32>
    %c1_i32 = arith.constant 1 : i32
    %32 = arith.muli %arg0, %c1_i32 : i32
    %33 = arith.addi %32, %arg1 : i32
    %34 = tpu.iota {dimensions = array<i32: 1>} : vector<1x8xi32>
    %c8_i32 = arith.constant 8 : i32
    %35 = arith.muli %33, %c8_i32 : i32
    %36 = vector.broadcast %35 : i32 to vector<1x8xi32>
    %37 = arith.addi %34, %36 : vector<1x8xi32>
    %c8_i32_10 = arith.constant 8 : i32
    %38 = vector.broadcast %c8_i32_10 : i32 to vector<1x8xi32>
    %39 = arith.cmpi slt, %37, %38 : vector<1x8xi32>
    %cst_11 = arith.constant 0.000000e+00 : f32
    %40 = vector.broadcast %cst_11 : f32 to vector<1x8xf32>
    %41 = arith.select %39, %31, %40 : vector<1x8xi1>, vector<1x8xf32>
    %c0_12 = arith.constant 0 : index
    %c0_13 = arith.constant 0 : index
    %42 = vector.load %arg4[%c0_12, %c0_13] : memref<8x128xf32, #tpu.memory_space<vmem>>, vector<8x128xf32>
    %43 = vector.shape_cast %41 : vector<1x8xf32> to vector<1x1x8xf32>
    %cst_14 = arith.constant dense<0.000000e+00> : vector<1xf32>
    %44 = vector.multi_reduction <add>, %43, %cst_14 [1, 2] : vector<1x1x8xf32> to vector<1xf32>
    %45 = vector.shape_cast %44 : vector<1xf32> to vector<1x1x1xf32>
    %46 = vector.extract %45[0, 0, 0] : f32 from vector<1x1x1xf32>
    %47 = vector.broadcast %46 : f32 to vector<8x128xf32>
    %48 = arith.addf %42, %47 : vector<8x128xf32>
    %c0_15 = arith.constant 0 : index
    %c0_16 = arith.constant 0 : index
    %49 = vector.load %arg4[%c0_15, %c0_16] : memref<8x128xf32, #tpu.memory_space<vmem>>, vector<8x128xf32>
    tpu.vector_store %arg4[%c0_15, %c0_16], %48 {strides = array<i32>} : memref<8x128xf32, #tpu.memory_space<vmem>>, vector<8x128xf32>,
    return
  }
  func.func @transform_0(%arg0: i32, %arg1: i32) -> (i32, i32) {
    %c1_i32 = arith.constant 1 : i32
    %0 = arith.muli %arg0, %c1_i32 : i32
    %1 = arith.addi %0, %arg1 : i32
    %c0_i32 = arith.constant 0 : i32
    %2 = arith.minsi %1, %c0_i32 : i32
    %c0_i32_0 = arith.constant 0 : i32
    %c0_i32_1 = arith.constant 0 : i32
    return %2, %c0_i32_0 : i32, i32
  }
  func.func @transform_1(%arg0: i32, %arg1: i32) -> (i32, i32) {
    %c1_i32 = arith.constant 1 : i32
    %0 = arith.muli %arg0, %c1_i32 : i32
    %1 = arith.addi %0, %arg1 : i32
    %c0_i32 = arith.constant 0 : i32
    %2 = arith.minsi %1, %c0_i32 : i32
    %c0_i32_0 = arith.constant 0 : i32
    %c0_i32_1 = arith.constant 0 : i32
    return %2, %c0_i32_0 : i32, i32
  }
  func.func @transform_2(%arg0: i32, %arg1: i32) -> (i32, i32) {
    %c0_i32 = arith.constant 0 : i32
    %c0_i32_0 = arith.constant 0 : i32
    return %arg0, %c0_i32 : i32, i32
  }
}

</mosaic_0001>

<llo_original>
// kernel: tpu_custom_call.1
$region0: #{tpu_custom_call.1}
  #allocation0 [shape = 'u32[]', space=smem, size = 0x4, offset = 0x4, fixed_abs, tag = 'smem constant byte address 0x4 - core index']
  #allocation1 [shape = 'u32[144,128]{1,0:T(1,128)}', space=vmem, size = 0x12000, scoped, tag = 'internal scratch']
  %s0 = inlined_call_operand.vmem [shape: f32[8,32], index: 0, kind: input, shape index: {}]
  %s1 = inlined_call_operand.vmem [shape: s32[8,1], index: 1, kind: input, shape index: {}]
  %s2 = inlined_call_operand.hbm [shape: f32[8,128], index: 2, kind: output, shape index: {}]
  %s3 = sld [smem:[#allocation0]]
  $region22: #{tpu_custom_call.1} parent=0
    _
  %s5 = ssub.s32 1, %s3
  %s6 = scalar_select 0, %s5, %s3
  $region1: #{tpu_custom_call.1} parent=0
    #allocation2 [shape = 'u8[4096]{0}', space=vmem, size = 0x1000, scoped, tag = 'output window, operand 0, single buffered']
    #allocation3 [shape = 's32[1]{0}', space=sflag, size = 0x4, scoped, tag = 'scoped memory for tpu_custom_call.1']
    %7 = vsyncpa [#allocation3], 0
    // Predicated region
    $region2: #{tpu_custom_call.1} parent=1 // pred_check
      _
    $region3: #{tpu_custom_call.1} parent=1 // pred_check_branch
      %9 = sbr.rel (0) target = $region5
    $region4: #{tpu_custom_call.1} parent=1 // pred_region
      %s10 = sadd.s32 0, 0
      %p11 = scmp.lt.s32.totalorder %s10, 0
      %s12 = scalar_select %p11, %s10, 0
      %p13 = scmp.lt.s32.totalorder %s12, 0
      %s14 = scalar_select %p13, %s12, 0
      %s15 = smul.addr %s14, 8
      %s16 = scalar_lea.vmem %s0, %s15
      %s17 = sadd.s32 0, 0
      %p18 = scmp.lt.s32.totalorder %s17, 0
      %s19 = scalar_select %p18, %s17, 0
    $region5: #{tpu_custom_call.1} parent=1 // pred_fallthru
      _
    // Predicated region
    $region6: #{tpu_custom_call.1} parent=1 // pred_check
      _
    $region7: #{tpu_custom_call.1} parent=1 // pred_check_branch
      %21 = sbr.rel (0) target = $region9
    $region8: #{tpu_custom_call.1} parent=1 // pred_region
      %s22 = sadd.s32 0, 0
      %p23 = scmp.lt.s32.totalorder %s22, 0
      %s24 = scalar_select %p23, %s22, 0
      %p25 = scmp.lt.s32.totalorder %s24, 0
      %s26 = scalar_select %p25, %s24, 0
      %s27 = smul.addr %s26, 8
      %s28 = scalar_lea.vmem %s1, %s27
      %s29 = sadd.s32 0, 0
      %p30 = scmp.lt.s32.totalorder %s29, 0
      %s31 = scalar_select %p30, %s29, 0
    $region9: #{tpu_custom_call.1} parent=1 // pred_fallthru
      _
    %s32 = sadd.s32 0, 0
    %p33 = scmp.lt.s32.totalorder %s32, 0
    %s34 = scalar_select %p33, %s32, 0
    %p35 = scmp.lt.s32.totalorder %s34, 0
    %s36 = scalar_select %p35, %s34, 0
    %s37 = smul.addr %s36, 8
    %s38 = scalar_lea.vmem %s0, %s37
    %s39 = sadd.s32 0, 0
    %p40 = scmp.lt.s32.totalorder %s39, 0
    %s41 = scalar_select %p40, %s39, 0
    %p42 = scmp.lt.s32.totalorder %s41, 0
    %s43 = scalar_select %p42, %s41, 0
    %s44 = smul.addr %s43, 8
    %s45 = scalar_lea.vmem %s1, %s44
    %s46 = sadd.s32 0, 0
    %p47 = scmp.lt.s32.totalorder %s46, 0
    %s48 = scalar_select %p47, %s46, 0
    %p49 = scmp.lt.s32.totalorder %s48, 0
    %s50 = scalar_select %p49, %s48, 0
    %s51 = smul.addr %s50, 8
    %s52 = scalar_lea.vmem %s0, %s51
    %s53 = sadd.s32 0, 0
    %p54 = scmp.lt.s32.totalorder %s53, 0
    %s55 = scalar_select %p54, %s53, 0
    %s56 = sadd.s32 0, 0
    %p57 = scmp.lt.s32.totalorder %s56, 0
    %s58 = scalar_select %p57, %s56, 0
    %p59 = scmp.lt.s32.totalorder %s58, 0
    %s60 = scalar_select %p59, %s58, 0
    %s61 = smul.addr %s60, 8
    %s62 = scalar_lea.vmem %s1, %s61
    %s63 = sadd.s32 0, 0
    %p64 = scmp.lt.s32.totalorder %s63, 0
    %s65 = scalar_select %p64, %s63, 0
    %p66 = scmp.eq.s32.totalorder 0, 0
    // Predicated region
    $region10: #{tpu_custom_call.1} parent=1 // pred_check
      %p67 = pneg %p66
    $region11: #{tpu_custom_call.1} parent=1 // pred_check_branch
      %69 = sbr.rel (%p67) target = $region13
    $region12: #{tpu_custom_call.1} parent=1 // pred_region
      %70 = vst [vmem:[#allocation2] sm:$0xff] 0.0
    $region13: #{tpu_custom_call.1} parent=1 // pred_fallthru
      _
    %v71 = vld [vmem:[%s52] sm:$0xff]
    %v72 = vld [vmem:[%s62] sm:$0xff]
    %v73 = vlaneseq
    %v74 = vand.u32 %v73, 127
    %vm75 = vcmask 261120
    %v76 = vsel %vm75, %v71, -inf
    %77 = vmax.xlane.f32.xlu0 %v76
    %v78 = vpop.xlane.xlu0 %77
    %v79 = vsub.f32 %v71, %v78
    %v80 = vmul.f32 %v79, 1.442695
    %v81 = vpow.pop %v80
    %v82 = vsel %vm75, %v81, 0.0
    %83 = vadd.xlane.f32.xlu0 %v82
    %v84 = vpop.xlane.xlu0 %83
    %85 = vset.pattern.permute.xlu0 0
    %86 = vperm.xlu0 %85, %v72
    %v87 = vpop.permute.xlu0 %86
    %vm88 = vcmp.eq.s32.totalorder %v74, %v87
    %v89 = vsel %vm88, %v79, 0.0
    %v90 = vsel %vm75, %v89, 0.0
    %91 = vadd.xlane.f32.xlu0 %v90
    %v92 = vpop.xlane.xlu0 %91
    %v93 = vlog2.pop %v84
    %v94 = vmul.f32 %v93, 0.6931472
    %v95 = vsub.f32 %v92, %v94
    %v96 = vsub.f32 0.0, %v95
    %v97 = vmul.f32 %v95, 1.442695
    %v98 = vpow.pop %v97
    %v99 = vsub.f32 1.0, %v98
    %v100 = vmul.f32 %v99, %v99
    %v101 = vmul.f32 %v100, 0.25
    %v102 = vmul.f32 %v101, %v96
    %s103 = sadd.s32 0, 0
    %s104 = smul.u32 %s103, 8
    %v105 = vstv %s104
    %v106 = vadd.s32 %v74, %v105
    %vm107 = vcmp.lt.s32.totalorder %v106, 8
    %v109 = vlaneseq
    %v110 = vshrl.u32 %v109, 7
    %v111 = vsub.s32 %v74, %v110
    %v112 = vrot.slane %v102, %v111
    %v114 = vsel %vm107, %v112, 0.0
    %v115 = vld [vmem:[#allocation2] sm:$0xff]
    %vm116 = vcmask 57344
    %v117 = vsel %vm116, %v114, 0.0
    %118 = vadd.xlane.f32.xlu0 %v117
    %v119 = vpop.xlane.xlu0 %118
    %v120 = vrot.slane %v119, 4
    %v121 = vadd.f32 %v119, %v120
    %v122 = vrot.slane %v121, 2
    %v123 = vadd.f32 %v121, %v122
    %v124 = vrot.slane %v123, 1
    %v125 = vadd.f32 %v123, %v124
    %s126 = vtos %v125
    %v127 = vstv %s126
    %v128 = vadd.f32 %v115, %v127
    %129 = vst [vmem:[#allocation2] sm:$0xff] %v128
    // Predicated region
    $region14: #{tpu_custom_call.1} parent=1 // pred_check
      _
    $region15: #{tpu_custom_call.1} parent=1 // pred_check_branch
      %131 = sbr.rel (0) target = $region17
    $region16: #{tpu_custom_call.1} parent=1 // pred_region
      %s133 = ssub.s32 128, 128
      %134 = vsyncadd [#allocation3], %s133
      %s136 = sshll.u32 [#allocation2], 4
      %s137 = int_to_ptr.vmem [resolvable:$true] %s136
      %139 = dma.vmem_to_hbm [thread:$0]  %s137, 128, %s2, [#allocation3]
    $region17: #{tpu_custom_call.1} parent=1 // pred_fallthru
      _
    // Predicated region
    $region18: #{tpu_custom_call.1} parent=1 // pred_check
      _
    $region19: #{tpu_custom_call.1} parent=1 // pred_check_branch
      %141 = sbr.rel (0) target = $region21
    $region20: #{tpu_custom_call.1} parent=1 // pred_region
      %142 = dma.done [#allocation3], 128
    $region21: #{tpu_custom_call.1} parent=1 // pred_fallthru
      _
    %143 = vsyncpa [#allocation3], 1

</llo_original>
